<compile_context>
chip_gen: v7x
topology: tpu7x:2x2x1
jax: 0.10.0
libtpu: 0.0.40
codegen_flags: <defaults>
</compile_context>

<pallas_src>
import functools

import jax
import jax.numpy as jnp
from jax.experimental import pallas as pl
from jax.experimental.pallas import tpu as pltpu


def _round_up(x, m):
    return ((x + m - 1) // m) * m


def _round_down(x, m):
    return (x // m) * m


def _int_pow(x, n):
    """x**n for a static int n >= 1 using only VPU multiplies."""
    acc = x
    result = None
    while n > 0:
        if n & 1:
            result = acc if result is None else result * acc
        n >>= 1
        if n > 0:
            acc = acc * acc
    return result


def _pow_p(x, p, p_int):
    if p_int is not None:
        return _int_pow(x, p_int)          # VPU-only, no EUP
    # Non-integer p: exp(p*log(x)) on the single EUP slot (correct, slower).
    return x ** p


def _gem_kernel_single(x_ref, o_ref, *, p, p_int, eps, inv_hw):
    """One full-H*W block per step.  x_ref: (row_tile, hw); o_ref: (1, row_tile)."""
    x = x_ref[...].astype(jnp.float32)
    x = jnp.maximum(x, eps)                         # clamp(min=eps)
    xp = _pow_p(x, p, p_int)
    s = jnp.sum(xp, axis=-1, keepdims=True)         # lane reduction -> (row_tile, 1)
    s = jnp.transpose(s) * inv_hw                   # sublanes -> lanes (XLU), lane-dense
    o_ref[...] = (s ** (1.0 / p)).astype(o_ref.dtype)


def _gem_kernel_chunked(x_ref, o_ref, acc_ref, *, p, p_int, eps, inv_hw, hw, hw_chunk):
    """H*W split over grid axis 1.  x_ref: (row_tile, hw_chunk); acc_ref: (row_tile, 1)."""
    j = pl.program_id(1)

    @pl.when(j == 0)
    def _():
        acc_ref[...] = jnp.zeros_like(acc_ref)

    x = x_ref[...].astype(jnp.float32)
    # The last chunk may read past the true H*W (edge block garbage); mask
    # those lanes to contribute exactly zero.
    col = jax.lax.broadcasted_iota(jnp.int32, x.shape, 1) + j * hw_chunk
    x = jnp.where(col < hw, jnp.maximum(x, eps), 0.0)
    xp = _pow_p(x, p, p_int)
    acc_ref[...] += jnp.sum(xp, axis=-1, keepdims=True)

    @pl.when(j == pl.num_programs(1) - 1)
    def _():
        s = jnp.transpose(acc_ref[...]) * inv_hw     # lane-dense output row
        o_ref[...] = (s ** (1.0 / p)).astype(o_ref.dtype)


def _tpu_config():
    """(per_block_bytes for one input block, vmem_limit_bytes, core_parallel?)."""
    per_block = 8 * 1024 * 1024          # conservative default (v7x: 64 MiB VMEM)
    vmem_limit = 48 * 1024 * 1024
    core_parallel = False
    try:
        kind = jax.devices()[0].device_kind.lower()
    except Exception:
        kind = ""
    if ("v7" in kind) or ("7x" in kind):
        core_parallel = True             # 2 TensorCores/chip: shard the row axis.
    elif any(t in kind for t in ("v4", "v5", "v6")):
        per_block = 16 * 1024 * 1024     # 128-MiB-VMEM parts: bigger tiles.
        vmem_limit = 96 * 1024 * 1024
    return per_block, vmem_limit, core_parallel


def gem_pallas(x, p=3, eps=1e-6, *, max_block_bytes=None):
    """x: (N, C, H, W) -> (N, C, 1, 1), GeM pooling (matches PyTorch gem())."""
    n, c, h, w = x.shape
    nc, hw = n * c, h * w
    out_dtype = x.dtype
    dtype_bytes = x.dtype.itemsize
    out_bytes_per_el = jnp.dtype(out_dtype).itemsize

    x2d = x.reshape(nc, hw)              # no jnp.pad: edge blocks handled by Pallas

    per_block, vmem_limit, core_parallel = _tpu_config()
    if max_block_bytes is not None:
        per_block = int(max_block_bytes)

    if core_parallel:
        row_sem = getattr(pltpu, "CORE_PARALLEL", "parallel")
        red_sem = getattr(pltpu, "ARBITRARY", "arbitrary")
    else:
        row_sem, red_sem = "parallel", "arbitrary"

    p_float = float(p)
    p_int = int(p_float) if (p_float.is_integer() and p_float >= 1.0) else None
    inv_hw = 1.0 / float(hw)

    hw_lane = _round_up(hw, 128)                    # VMEM lane-padded row footprint
    min_rows = nc if nc < 8 else 8
    chunked = (min_rows * hw_lane * dtype_bytes) > per_block

    common_kwargs = dict(p=p_float, p_int=p_int, eps=float(eps), inv_hw=inv_hw)

    if not chunked:
        # ---- single H*W block per step -----------------------------------
        row_tile = max(per_block // (hw_lane * dtype_bytes), 1)
        row_tile = min(row_tile, 32768)
        if row_tile >= nc:
            row_tile = nc                             # full row dim: always legal
        else:
            row_tile = max(8, _round_down(row_tile, 8))
        num_row_tiles = pl.cdiv(nc, row_tile)

        kernel = functools.partial(_gem_kernel_single, **common_kwargs)
        grid = (num_row_tiles,)
        in_specs = [pl.BlockSpec((row_tile, hw), lambda i: (i, 0))]
        out_specs = pl.BlockSpec((1, row_tile), lambda i: (i, 0))
        scratch_shapes = ()
        dims = (row_sem,)
    else:
        # ---- H*W too large for one block: chunk the spatial reduction ----
        row_tile = 256 if nc > 256 else nc            # 256 is a multiple of 8
        hw_chunk = max(_round_down(per_block // (row_tile * dtype_bytes), 128), 128)
        if hw_chunk >= hw:
            hw_chunk = hw                              # degenerate: one full chunk
        num_row_tiles = pl.cdiv(nc, row_tile)
        num_hw_chunks = pl.cdiv(hw, hw_chunk)

        kernel = functools.partial(_gem_kernel_chunked, hw=hw, hw_chunk=hw_chunk,
                                   **common_kwargs)
        grid = (num_row_tiles, num_hw_chunks)
        in_specs = [pl.BlockSpec((row_tile, hw_chunk), lambda i, j: (i, j))]
        out_specs = pl.BlockSpec((1, row_tile), lambda i, j: (i, 0))
        scratch_shapes = (pltpu.VMEM((row_tile, 1), jnp.float32),)
        dims = (row_sem, red_sem)

    trans = 2 * nc if p_int is not None else 2 * nc + 2 * nc * hw
    cost = pl.CostEstimate(
        flops=4 * nc * hw,
        transcendentals=trans,
        bytes_accessed=nc * hw * dtype_bytes
        + int(num_row_tiles) * int(row_tile) * out_bytes_per_el,
    )

    out2d = pl.pallas_call(
        kernel,
        out_shape=jax.ShapeDtypeStruct((int(num_row_tiles), int(row_tile)), out_dtype),
        grid_spec=pltpu.PrefetchScalarGridSpec(
            num_scalar_prefetch=0,
            grid=grid,
            in_specs=in_specs,
            out_specs=out_specs,
            scratch_shapes=scratch_shapes,
        ),
        compiler_params=pltpu.CompilerParams(
            dimension_semantics=dims,
            vmem_limit_bytes=vmem_limit,
        ),
        cost_estimate=cost,
    )(x2d)

    # Rows are stored tile-major, lane-dense; garbage rows of a partial last
    # row tile (if any) are sliced off here before any consumer sees them.
    return out2d.reshape(-1)[:nc].reshape(n, c, 1, 1)


def gem_reference(x, p=3.0, eps=1e-6):
    """Pure-JAX reference matching the PyTorch gem()."""
    xc = jnp.maximum(x, eps) ** p
    pooled = jnp.mean(xc, axis=(-2, -1), keepdims=True)
    return pooled ** (1.0 / p)


if __name__ == "__main__":
    # GeM module defaults: p=3 (non-trainable), eps=1e-6. No weights to init.
    P = 3
    EPS = 1e-6
    key = jax.random.PRNGKey(0)

    def _check(xx, ref_shape, **kwargs):
        out = gem_pallas(xx, p=P, eps=EPS, **kwargs)
        jax.block_until_ready(out)
        ref = gem_reference(xx, p=float(P), eps=EPS)
        assert out.shape == ref_shape, (out.shape, ref_shape)
        assert jnp.allclose(out, ref, atol=1e-5, rtol=1e-4), "mismatch vs reference"
        return out

    # 1) Primary shape (lane-aligned: H*W = 256), single block.
    x1 = jax.random.uniform(key, (2, 4, 16, 16), dtype=jnp.float32)   # NCHW
    _check(x1, (2, 4, 1, 1))

    # 2) Non-128-aligned spatial dim (H*W = 49) and nc < 8 (full-dim blocks).
    x2 = jax.random.uniform(jax.random.PRNGKey(0), (2, 3, 7, 7), dtype=jnp.float32)
    _check(x2, (2, 3, 1, 1))

    # 3) Force the chunked-H*W path (tiny block budget): 2 spatial chunks,
    #    last chunk partially masked (H*W = 200, chunk = 128).
    x3 = jax.random.uniform(jax.random.PRNGKey(1), (1, 4, 10, 20), dtype=jnp.float32)
    _check(x3, (1, 4, 1, 1), max_block_bytes=2048)

    # 4) Force multiple row tiles with a partial last row block (nc = 10, tile = 8).
    x4 = jax.random.uniform(jax.random.PRNGKey(2), (2, 5, 16, 16), dtype=jnp.float32)
    _check(x4, (2, 5, 1, 1), max_block_bytes=8192)

    print("KERNEL_OK")
</pallas_src>

<mosaic_0001>
module attributes {stable_mosaic.version = 11 : i64} {
  func.func @_gem_kernel_single(%arg0: i32, %arg1: memref<8x256xf32, #tpu.memory_space<vmem>>, %arg2: memref<1x8xf32, #tpu.memory_space<vmem>>) attributes {dimension_semantics = [#tpu.dimension_semantics<parallel>], iteration_bounds = array<i64: 1>, scalar_prefetch = 0 : i64, scratch_operands = 0 : i64, tpu.core_type = #tpu.core_type<tc>, window_params = [{transform_indices = @transform_0, window_bounds = array<i64: 8, 256>}, {transform_indices = @transform_1, window_bounds = array<i64: 1, 8>}]} {
    %c0 = arith.constant 0 : index
    %c0_0 = arith.constant 0 : index
    %0 = vector.load %arg1[%c0, %c0_0] : memref<8x256xf32, #tpu.memory_space<vmem>>, vector<8x256xf32>
    %cst = arith.constant 9.99999997E-7 : f32
    %1 = vector.broadcast %cst : f32 to vector<8x256xf32>
    %2 = arith.maximumf %0, %1 : vector<8x256xf32>
    %3 = arith.mulf %2, %2 : vector<8x256xf32>
    %4 = arith.mulf %2, %3 : vector<8x256xf32>
    %cst_1 = arith.constant dense<0.000000e+00> : vector<8xf32>
    %5 = vector.multi_reduction <add>, %4, %cst_1 [1] : vector<8x256xf32> to vector<8xf32>
    %6 = vector.shape_cast %5 : vector<8xf32> to vector<8x1xf32>
    %7 = tpu.transpose %6, [1, 0] : vector<8x1xf32> -> vector<1x8xf32>
    %cst_2 = arith.constant 3.906250e-03 : f32
    %8 = vector.broadcast %cst_2 : f32 to vector<1x8xf32>
    %9 = arith.mulf %7, %8 : vector<1x8xf32>
    %cst_3 = arith.constant 0.333333343 : f32
    %10 = vector.broadcast %cst_3 : f32 to vector<1x8xf32>
    %11 = math.powf %9, %10 : vector<1x8xf32>
    %c0_4 = arith.constant 0 : index
    %c0_5 = arith.constant 0 : index
    %12 = vector.load %arg2[%c0_4, %c0_5] : memref<1x8xf32, #tpu.memory_space<vmem>>, vector<1x8xf32>
    tpu.vector_store %arg2[%c0_4, %c0_5], %11 {strides = array<i32>} : memref<1x8xf32, #tpu.memory_space<vmem>>, vector<1x8xf32>,
    return
  }
  func.func @transform_0(%arg0: i32) -> (i32, i32) {
    %c0_i32 = arith.constant 0 : i32
    %c0_i32_0 = arith.constant 0 : i32
    return %arg0, %c0_i32 : i32, i32
  }
  func.func @transform_1(%arg0: i32) -> (i32, i32) {
    %c0_i32 = arith.constant 0 : i32
    %c0_i32_0 = arith.constant 0 : i32
    return %arg0, %c0_i32 : i32, i32
  }
}

</mosaic_0001>

<llo_original>
// kernel: tpu_custom_call.1
$region0: #{tpu_custom_call.1}
  #allocation0 [shape = 'u32[]', space=smem, size = 0x4, offset = 0x4, fixed_abs, tag = 'smem constant byte address 0x4 - core index']
  #allocation1 [shape = 'u32[144,128]{1,0:T(1,128)}', space=vmem, size = 0x12000, scoped, tag = 'internal scratch']
  %s0 = inlined_call_operand.hbm [shape: f32[8,256], index: 0, kind: input, shape index: {}]
  %s1 = inlined_call_operand.hbm [shape: f32[1,8], index: 1, kind: output, shape index: {}]
  %s2 = sld [smem:[#allocation0]]
  $region18: #{tpu_custom_call.1} parent=0
    _
  %s4 = ssub.s32 1, %s2
  %s5 = scalar_select 0, %s4, %s2
  $region1: #{tpu_custom_call.1} parent=0
    #allocation2 [shape = 'u8[8192]{0}', space=vmem, size = 0x2000, scoped, tag = 'input window, operand 0, single buffered']
    #allocation3 [shape = 's32[1]{0}', space=sflag, size = 0x4, scoped, tag = 'scoped memory for tpu_custom_call.1']
    #allocation4 [shape = 's32[1]{0}', space=sflag, size = 0x4, scoped, tag = 'scoped memory for tpu_custom_call.1']
    #allocation5 [shape = 'u8[512]{0}', space=vmem, size = 0x400, scoped, tag = 'output window, operand 0, single buffered']
    %6 = vsyncpa [#allocation3], 0
    %7 = vsyncpa [#allocation4], 0
    // Predicated region
    $region2: #{tpu_custom_call.1} parent=1 // pred_check
      _
    $region3: #{tpu_custom_call.1} parent=1 // pred_check_branch
      %9 = sbr.rel (0) target = $region5
    $region4: #{tpu_custom_call.1} parent=1 // pred_region
      %s11 = ssub.s32 256, 256
      %12 = vsyncadd [#allocation3], %s11
      %s14 = sshll.u32 [#allocation2], 4
      %s15 = int_to_ptr.vmem [resolvable:$true] %s14
      %17 = dma.hbm_to_vmem [thread:$0]  %s0, 256, %s15, [#allocation3]
    $region5: #{tpu_custom_call.1} parent=1 // pred_fallthru
      _
    // Predicated region
    $region6: #{tpu_custom_call.1} parent=1 // pred_check
      _
    $region7: #{tpu_custom_call.1} parent=1 // pred_check_branch
      %19 = sbr.rel (0) target = $region9
    $region8: #{tpu_custom_call.1} parent=1 // pred_region
      %20 = dma.done [#allocation3], 256
    $region9: #{tpu_custom_call.1} parent=1 // pred_fallthru
      _
    %v21 = vld [vmem:[#allocation2] sm:$0xff]
    %v22 = vld [vmem:[#allocation2 + $0x8] sm:$0xff]
    %v23 = vmax.f32 %v21, 1e-06
    %v24 = vmax.f32 %v22, 1e-06
    %v25 = vmul.f32 %v23, %v23
    %v26 = vmul.f32 %v24, %v24
    %v27 = vmul.f32 %v23, %v25
    %v28 = vmul.f32 %v24, %v26
    %v29 = vadd.f32 %v27, %v28
    %30 = vadd.xlane.f32.xlu0 %v29
    %v31 = vpop.xlane.xlu0 %30
    %32 = vxpose.xlu0.b32.start [1/16] %v31, 128
    %33 = vxpose.xlu0.b32.cont [2/16] 0.0, 128
    %34 = vxpose.xlu0.b32.cont [3/16] 0.0, 128
    %35 = vxpose.xlu0.b32.cont [4/16] 0.0, 128
    %36 = vxpose.xlu0.b32.cont [5/16] 0.0, 128
    %37 = vxpose.xlu0.b32.cont [6/16] 0.0, 128
    %38 = vxpose.xlu0.b32.cont [7/16] 0.0, 128
    %39 = vxpose.xlu0.b32.cont [8/16] 0.0, 128
    %40 = vxpose.xlu0.b32.cont [9/16] 0.0, 128
    %41 = vxpose.xlu0.b32.cont [10/16] 0.0, 128
    %42 = vxpose.xlu0.b32.cont [11/16] 0.0, 128
    %43 = vxpose.xlu0.b32.cont [12/16] 0.0, 128
    %44 = vxpose.xlu0.b32.cont [13/16] 0.0, 128
    %45 = vxpose.xlu0.b32.cont [14/16] 0.0, 128
    %46 = vxpose.xlu0.b32.cont [15/16] 0.0, 128
    %47 = vxpose.xlu0.b32.end [16/16] 0.0, 128
    %v48 = vpop.trf.xlu0
    %v49 = vpop.trf.xlu0
    %v50 = vpop.trf.xlu0
    %v51 = vpop.trf.xlu0
    %v52 = vpop.trf.xlu0
    %v53 = vpop.trf.xlu0
    %v54 = vpop.trf.xlu0
    %v55 = vpop.trf.xlu0
    %v56 = vpop.trf.xlu0
    %v57 = vpop.trf.xlu0
    %v58 = vpop.trf.xlu0
    %v59 = vpop.trf.xlu0
    %v60 = vpop.trf.xlu0
    %v61 = vpop.trf.xlu0
    %v62 = vpop.trf.xlu0
    %v63 = vpop.trf.xlu0
    %v64 = vmul.f32 %v48, 0.00390625
    %v65 = vpow.f32 %v64, 0.33333334
    %vm66 = vcmask 57344
    %67 = vst.msk [vmem:[#allocation5] sm:$0x1] %vm66, %v65
    // Predicated region
    $region10: #{tpu_custom_call.1} parent=1 // pred_check
      _
    $region11: #{tpu_custom_call.1} parent=1 // pred_check_branch
      %69 = sbr.rel (0) target = $region13
    $region12: #{tpu_custom_call.1} parent=1 // pred_region
      %s71 = ssub.s32 16, 16
      %72 = vsyncadd [#allocation4], %s71
      %s74 = sshll.u32 [#allocation5], 4
      %s75 = int_to_ptr.vmem [resolvable:$true] %s74
      %77 = dma.vmem_to_hbm [thread:$0]  %s75, 16, %s1, [#allocation4]
    $region13: #{tpu_custom_call.1} parent=1 // pred_fallthru
      _
    // Predicated region
    $region14: #{tpu_custom_call.1} parent=1 // pred_check
      _
    $region15: #{tpu_custom_call.1} parent=1 // pred_check_branch
      %79 = sbr.rel (0) target = $region17
    $region16: #{tpu_custom_call.1} parent=1 // pred_region
      %80 = dma.done [#allocation4], 16
    $region17: #{tpu_custom_call.1} parent=1 // pred_fallthru
      _
    %81 = vsyncpa [#allocation3], 1
    %82 = vsyncpa [#allocation4], 1

</llo_original>
